<compile_context>
chip_gen: v6e
topology: v6e:2x2x1
jax: 0.10.0
libtpu: 0.0.40
codegen_flags: <defaults>
</compile_context>

<pallas_src>
import functools

import jax
import jax.numpy as jnp
from jax import lax
from jax.experimental import pallas as pl
from jax.experimental.pallas import tpu as pltpu

MARGIN = 0.2
SCALE = 30.0
EPS = 1e-12           # torch F.normalize default eps
NEG_INF = -1e30       # mask value for lane-padded speaker columns


def _round_up(x, m):
    return -(-x // m) * m


def _cdiv(a, b):
    return -(-a // b)


def svmodel_kernel(h_ref, w1_ref, b1_ref, wn_ref, labels_ref,
                   proj_ref, loss_ref, sum_ref, *, seq_len, num_speakers):
    t = pl.program_id(1)
    tT = h_ref.shape[1]

    # ---- time-sum accumulation (streamed tile -> f32 accumulator) ----------
    @pl.when(t == 0)
    def _():
        sum_ref[...] = jnp.zeros_like(sum_ref)

    h = h_ref[...]                                          # (bB, tT, H)
    if seq_len % tT != 0:                                   # static: ragged tail
        tpos = t * tT + lax.broadcasted_iota(jnp.int32, h.shape, 1)
        h = jnp.where(tpos < seq_len, h, jnp.zeros_like(h))
    sum_ref[...] += jnp.sum(h, axis=1, dtype=jnp.float32)   # fused upcast

    # ---- Linear + AAM + CE tail, only once on the last time tile -----------
    @pl.when(t == pl.num_programs(1) - 1)
    def _():
        emb = sum_ref[...] * (1.0 / seq_len)                # mean over true T
        proj = jnp.dot(emb, w1_ref[...],
                       preferred_element_type=jnp.float32) + b1_ref[...]
        proj_ref[...] = proj.astype(proj_ref.dtype)

        # F.normalize(embeddings): x / max(||x||_2, eps)
        nrm = jnp.sqrt(jnp.sum(proj * proj, axis=-1, keepdims=True))
        normed = proj / jnp.maximum(nrm, EPS)               # (bB, E)

        # AAM weight already L2-normalized, transposed, lane-padded, bf16.
        cos = jnp.dot(normed.astype(wn_ref.dtype), wn_ref[...],
                      preferred_element_type=jnp.float32)   # (bB, S_pad)

        class_ids = lax.broadcasted_iota(jnp.int32, cos.shape, 1)
        onehot = class_ids == labels_ref[...]               # labels: (bB, 1)
        logits = jnp.where(onehot, cos - MARGIN, cos) * SCALE
        if cos.shape[1] != num_speakers:                    # static lane padding
            logits = jnp.where(class_ids < num_speakers, logits, NEG_INF)

        # per-sample cross entropy: logsumexp(l_i) - l_i[y_i]
        m = jnp.max(logits, axis=-1, keepdims=True)
        lse = m + jnp.log(jnp.sum(jnp.exp(logits - m), axis=-1, keepdims=True))
        tgt = jnp.sum(jnp.where(onehot, logits, 0.0), axis=-1, keepdims=True)
        loss_ref[...] = lse - tgt                           # (bB, 1)


def _resident_spec(shape):
    """Grid-invariant input: constant index map, single-buffered if supported."""
    idx = lambda b, t: (0, 0)
    try:
        return pl.BlockSpec(shape, idx, pipeline_mode=pl.Buffered(1))
    except (TypeError, AttributeError):
        return pl.BlockSpec(shape, idx)


def sv_model_forward(hidden, w_proj, b_proj, w_aam, labels, *,
                     time_tile=None, batch_block=None):
    """hidden: (B,T,H); w_proj: (H,E); b_proj: (E,); w_aam: (S,E);
    labels: (B,) int. Returns (loss, proj)."""
    B, T, H = hidden.shape
    E = w_proj.shape[1]
    S = w_aam.shape[0]
    S_pad = _round_up(S, 128)
    itemsize = jnp.dtype(hidden.dtype).itemsize
    align = 8 if itemsize >= 4 else 16

    # ---- batch blocking (v7x: two TensorCores stream disjoint blocks) ------
    if batch_block is not None:
        bB = batch_block
    elif B % 16 == 0:
        bB = B // 2          # 2 blocks -> one per TC on v7x; no-op on v5e/v6e
    else:
        bB = B
    assert B % bB == 0 and (bB % 8 == 0 or bB == B), "bad batch block"
    num_b = B // bB

    # ---- generation-aware VMEM budget / time tile sizing -------------------
    resident = ((H * E) * 4 + E * 4          # W_proj + b_proj (f32, 1 buffer)
                + E * S_pad * 2              # W_aam^T (bf16, 1 buffer)
                + 2 * bB * 4                 # labels (int32)
                + 2 * (bB * E + bB) * 4      # proj + per-sample loss outputs
                + bB * H * 4)                # f32 accumulator scratch
    try:
        vmem_cap = int(pltpu.get_tpu_info().vmem_capacity_bytes)
    except Exception:
        vmem_cap = 64 << 20                  # conservative (v7x per-TC VMEM)

    if time_tile is None:
        usable = vmem_cap * 4 // 5           # headroom for Mosaic internals
        per_buf = max(usable - resident, 2 * bB * align * H * itemsize) // 2
        tT_cap = max(align, (per_buf // (bB * H * itemsize)) // align * align)
        tT_target = _round_up(_cdiv(T, 6), align)   # keep several grid steps
        tT = max(align, min(tT_cap, tT_target, _round_up(T, align)))
    else:
        tT = time_tile
    num_t = _cdiv(T, tT)

    vmem_est = 2 * bB * tT * H * itemsize + resident
    vmem_limit = int(min(max(vmem_est * 5 // 4, 4 << 20), vmem_cap))

    # ---- wrapper-side layout plumbing (no extra HBM pass over hidden) ------
    # AAM weight: L2-normalize rows (f32), transpose to (E, S), lane-pad, bf16.
    w_n = w_aam.astype(jnp.float32)
    w_n = w_n / jnp.maximum(
        jnp.sqrt(jnp.sum(w_n * w_n, axis=-1, keepdims=True)), EPS)
    w_n_t = jnp.pad(w_n.T, ((0, 0), (0, S_pad - S))).astype(jnp.bfloat16)

    w_proj_f32 = w_proj.astype(jnp.float32)
    b_proj2d = b_proj.reshape(1, E).astype(jnp.float32)
    labels2d = labels.reshape(B, 1).astype(jnp.int32)

    kernel = functools.partial(svmodel_kernel, seq_len=T, num_speakers=S)

    cost = pl.CostEstimate(
        flops=2 * B * (H * E + E * S_pad) + B * T * H,
        transcendentals=B * (S_pad + 2),
        bytes_accessed=(B * T * H * itemsize + (H * E + E) * 4
                        + E * S_pad * 2 + B * 4 + B * (E + 1) * 4),
    )

    grid_spec = pltpu.PrefetchScalarGridSpec(
        num_scalar_prefetch=0,
        grid=(num_b, num_t),
        in_specs=[
            pl.BlockSpec((bB, tT, H), lambda b, t: (b, t, 0)),  # hidden tile
            _resident_spec((H, E)),                             # W_proj
            _resident_spec((1, E)),                             # b_proj
            _resident_spec((E, S_pad)),                         # norm(W_aam)^T
            pl.BlockSpec((bB, 1), lambda b, t: (b, 0)),         # labels
        ],
        out_specs=(
            pl.BlockSpec((bB, E), lambda b, t: (b, 0)),         # proj
            pl.BlockSpec((bB, 1), lambda b, t: (b, 0)),         # per-sample CE
        ),
        scratch_shapes=[pltpu.VMEM((bB, H), jnp.float32)],
    )

    proj, loss_ps = pl.pallas_call(
        kernel,
        out_shape=(
            jax.ShapeDtypeStruct((B, E), jnp.float32),
            jax.ShapeDtypeStruct((B, 1), jnp.float32),
        ),
        grid_spec=grid_spec,
        compiler_params=pltpu.CompilerParams(
            dimension_semantics=("parallel", "arbitrary"),
            vmem_limit_bytes=vmem_limit),
        cost_estimate=cost,
    )(hidden, w_proj_f32, b_proj2d, w_n_t, labels2d)

    loss = jnp.mean(loss_ps)                 # CrossEntropyLoss mean reduction
    return loss, proj


def _reference_forward(hidden, w_proj, b_proj, w_aam, labels):
    # pure-JAX reference; mirrors the kernel's single bf16 rounding on the
    # cosine matmul operands (the only intentional deviation from f32 torch).
    emb = jnp.mean(hidden.astype(jnp.float32), axis=1)
    proj = jnp.dot(emb, w_proj, precision=lax.Precision.HIGHEST) + b_proj
    ne = proj / jnp.maximum(
        jnp.sqrt(jnp.sum(proj * proj, -1, keepdims=True)), EPS)
    nw = w_aam / jnp.maximum(
        jnp.sqrt(jnp.sum(w_aam * w_aam, -1, keepdims=True)), EPS)
    cos = jnp.dot(ne.astype(jnp.bfloat16), nw.astype(jnp.bfloat16).T,
                  preferred_element_type=jnp.float32)
    onehot = jax.nn.one_hot(labels, cos.shape[1], dtype=jnp.bool_)
    logits = jnp.where(onehot, cos - MARGIN, cos) * SCALE
    lse = jax.scipy.special.logsumexp(logits, axis=-1)
    tgt = jnp.take_along_axis(logits, labels[:, None], axis=-1)[:, 0]
    return jnp.mean(lse - tgt), proj


if __name__ == "__main__":
    # Small deterministic shapes consistent with the forward pass.
    # B=16 exercises the batch-parallel axis (two blocks of 8); T=20 is not a
    # multiple of the time tile so the in-kernel ragged mask is exercised;
    # S=10 is not a multiple of 128 so the lane padding/mask is exercised.
    B, T, H, E, S = 16, 20, 32, 256, 10

    key = jax.random.PRNGKey(0)
    k_h, k_w1, k_b1, k_w2, k_lab = jax.random.split(key, 5)

    # Stand-in for wav2vec2 last_hidden_state.
    hidden = jax.random.normal(k_h, (B, T, H), dtype=jnp.float32)

    # nn.Linear(H, 256): weight [E, H] in torch -> pass transposed [H, E].
    w_proj = (jax.random.normal(k_w1, (H, E), dtype=jnp.float32)
              * (1.0 / jnp.sqrt(H)))
    b_proj = jax.random.normal(k_b1, (E,), dtype=jnp.float32) * 0.01

    # AAM weight: xavier_uniform_ on [S, E].
    limit = jnp.sqrt(6.0 / (S + E))
    w_aam = jax.random.uniform(k_w2, (S, E), dtype=jnp.float32,
                               minval=-limit, maxval=limit)

    labels = jax.random.randint(k_lab, (B,), 0, S, dtype=jnp.int32)

    fwd = jax.jit(sv_model_forward)
    loss, proj = fwd(hidden, w_proj, b_proj, w_aam, labels)
    jax.block_until_ready((loss, proj))

    ref_loss, ref_proj = _reference_forward(hidden, w_proj, b_proj, w_aam,
                                            labels)
    assert proj.shape == (B, E) and loss.shape == ()
    assert jnp.allclose(proj, ref_proj, rtol=1e-2, atol=1e-2), "proj mismatch"
    assert jnp.allclose(loss, ref_loss, rtol=1e-2, atol=1e-2), "loss mismatch"
    print("KERNEL_OK")
</pallas_src>

<mosaic_0001>
module attributes {stable_mosaic.version = 11 : i64} {
  func.func @svmodel_kernel(%arg0: i32, %arg1: i32, %arg2: memref<8x8x32xf32, #tpu.memory_space<vmem>>, %arg3: memref<32x256xf32, #tpu.memory_space<vmem>>, %arg4: memref<1x256xf32, #tpu.memory_space<vmem>>, %arg5: memref<256x128xbf16, #tpu.memory_space<vmem>>, %arg6: memref<8x1xi32, #tpu.memory_space<vmem>>, %arg7: memref<8x256xf32, #tpu.memory_space<vmem>>, %arg8: memref<8x1xf32, #tpu.memory_space<vmem>>, %arg9: memref<8x32xf32, #tpu.memory_space<vmem>>) attributes {dimension_semantics = [#tpu.dimension_semantics<parallel>, #tpu.dimension_semantics<arbitrary>], iteration_bounds = array<i64: 2, 3>, scalar_prefetch = 0 : i64, scratch_operands = 1 : i64, tpu.core_type = #tpu.core_type<tc>, window_params = [{transform_indices = @transform_0, window_bounds = array<i64: 8, 8, 32>}, {pipeline_mode = #tpu.pipeline_mode<synchronous>, transform_indices = @transform_1, window_bounds = array<i64: 32, 256>}, {pipeline_mode = #tpu.pipeline_mode<synchronous>, transform_indices = @transform_2, window_bounds = array<i64: 1, 256>}, {pipeline_mode = #tpu.pipeline_mode<synchronous>, transform_indices = @transform_3, window_bounds = array<i64: 256, 128>}, {transform_indices = @transform_4, window_bounds = array<i64: 8, 1>}, {transform_indices = @transform_5, window_bounds = array<i64: 8, 256>}, {transform_indices = @transform_6, window_bounds = array<i64: 8, 1>}]} {
    %c0_i32 = arith.constant 0 : i32
    %0 = arith.cmpi eq, %arg1, %c0_i32 : i32
    %1 = arith.extui %0 : i1 to i32
    %c0_i32_0 = arith.constant 0 : i32
    %2 = arith.cmpi ne, %1, %c0_i32_0 : i32
    scf.if %2 {
      %cst_9 = arith.constant 0.000000e+00 : f32
      %19 = vector.broadcast %cst_9 : f32 to vector<8x32xf32>
      %c0_10 = arith.constant 0 : index
      %c0_11 = arith.constant 0 : index
      %20 = vector.load %arg9[%c0_10, %c0_11] : memref<8x32xf32, #tpu.memory_space<vmem>>, vector<8x32xf32>
      tpu.vector_store %arg9[%c0_10, %c0_11], %19 {strides = array<i32>} : memref<8x32xf32, #tpu.memory_space<vmem>>, vector<8x32xf32>,
    } else {
    }
    %c0 = arith.constant 0 : index
    %c0_1 = arith.constant 0 : index
    %c0_2 = arith.constant 0 : index
    %3 = vector.load %arg2[%c0, %c0_1, %c0_2] : memref<8x8x32xf32, #tpu.memory_space<vmem>>, vector<8x8x32xf32>
    %c8_i32 = arith.constant 8 : i32
    %4 = arith.muli %arg1, %c8_i32 : i32
    %5 = tpu.iota {dimensions = array<i32: 1>} : vector<8x8x32xi32>
    %6 = vector.broadcast %4 : i32 to vector<8x8x32xi32>
    %7 = arith.addi %6, %5 : vector<8x8x32xi32>
    %c20_i32 = arith.constant 20 : i32
    %8 = vector.broadcast %c20_i32 : i32 to vector<8x8x32xi32>
    %9 = arith.cmpi slt, %7, %8 : vector<8x8x32xi32>
    %cst = arith.constant 0.000000e+00 : f32
    %10 = vector.broadcast %cst : f32 to vector<8x8x32xf32>
    %11 = arith.select %9, %3, %10 : vector<8x8x32xi1>, vector<8x8x32xf32>
    %c0_3 = arith.constant 0 : index
    %c0_4 = arith.constant 0 : index
    %12 = vector.load %arg9[%c0_3, %c0_4] : memref<8x32xf32, #tpu.memory_space<vmem>>, vector<8x32xf32>
    %cst_5 = arith.constant dense<0.000000e+00> : vector<8x32xf32>
    %13 = vector.multi_reduction <add>, %11, %cst_5 [1] : vector<8x8x32xf32> to vector<8x32xf32>
    %14 = arith.addf %12, %13 : vector<8x32xf32>
    %c0_6 = arith.constant 0 : index
    %c0_7 = arith.constant 0 : index
    %15 = vector.load %arg9[%c0_6, %c0_7] : memref<8x32xf32, #tpu.memory_space<vmem>>, vector<8x32xf32>
    tpu.vector_store %arg9[%c0_6, %c0_7], %14 {strides = array<i32>} : memref<8x32xf32, #tpu.memory_space<vmem>>, vector<8x32xf32>,
    %c2_i32 = arith.constant 2 : i32
    %16 = arith.cmpi eq, %arg1, %c2_i32 : i32
    %17 = arith.extui %16 : i1 to i32
    %c0_i32_8 = arith.constant 0 : i32
    %18 = arith.cmpi ne, %17, %c0_i32_8 : i32
    scf.if %18 {
      %c0_9 = arith.constant 0 : index
      %c0_10 = arith.constant 0 : index
      %19 = vector.load %arg9[%c0_9, %c0_10] : memref<8x32xf32, #tpu.memory_space<vmem>>, vector<8x32xf32>
      %cst_11 = arith.constant 5.000000e-02 : f32
      %20 = vector.broadcast %cst_11 : f32 to vector<8x32xf32>
      %21 = arith.mulf %19, %20 : vector<8x32xf32>
      %c0_12 = arith.constant 0 : index
      %c0_13 = arith.constant 0 : index
      %22 = vector.load %arg3[%c0_12, %c0_13] : memref<32x256xf32, #tpu.memory_space<vmem>>, vector<32x256xf32>
      %cst_14 = arith.constant dense<0.000000e+00> : vector<8x256xf32>
      %23 = tpu.matmul %21, %22, %cst_14 {dimension_numbers = #tpu.dot_dimension_numbers<[1], [0], [0], [1], [0, 0, 1, 1], [], []>} : vector<8x32xf32>, vector<32x256xf32>, vector<8x256xf32> -> vector<8x256xf32>
      %c0_15 = arith.constant 0 : index
      %c0_16 = arith.constant 0 : index
      %24 = vector.load %arg4[%c0_15, %c0_16] : memref<1x256xf32, #tpu.memory_space<vmem>>, vector<1x256xf32>
      %25 = vector.broadcast %24 : vector<1x256xf32> to vector<8x256xf32>
      %26 = arith.addf %23, %25 : vector<8x256xf32>
      %c0_17 = arith.constant 0 : index
      %c0_18 = arith.constant 0 : index
      %27 = vector.load %arg7[%c0_17, %c0_18] : memref<8x256xf32, #tpu.memory_space<vmem>>, vector<8x256xf32>
      tpu.vector_store %arg7[%c0_17, %c0_18], %26 {strides = array<i32>} : memref<8x256xf32, #tpu.memory_space<vmem>>, vector<8x256xf32>,
      %28 = arith.mulf %26, %26 : vector<8x256xf32>
      %cst_19 = arith.constant dense<0.000000e+00> : vector<8xf32>
      %29 = vector.multi_reduction <add>, %28, %cst_19 [1] : vector<8x256xf32> to vector<8xf32>
      %30 = vector.shape_cast %29 : vector<8xf32> to vector<8x1xf32>
      %31 = math.sqrt %30 : vector<8x1xf32>
      %cst_20 = arith.constant 9.99999996E-13 : f32
      %32 = vector.broadcast %cst_20 : f32 to vector<8x1xf32>
      %33 = arith.maximumf %31, %32 : vector<8x1xf32>
      %34 = vector.broadcast %33 : vector<8x1xf32> to vector<8x256xf32>
      %35 = arith.divf %26, %34 : vector<8x256xf32>
      %36 = arith.truncf %35 : vector<8x256xf32> to vector<8x256xbf16>
      %c0_21 = arith.constant 0 : index
      %c0_22 = arith.constant 0 : index
      %37 = vector.load %arg5[%c0_21, %c0_22] : memref<256x128xbf16, #tpu.memory_space<vmem>>, vector<256x128xbf16>
      %cst_23 = arith.constant dense<0.000000e+00> : vector<8x128xf32>
      %38 = tpu.matmul %36, %37, %cst_23 {dimension_numbers = #tpu.dot_dimension_numbers<[1], [0], [0], [1], [0, 0, 1, 1], [], []>} : vector<8x256xbf16>, vector<256x128xbf16>, vector<8x128xf32> -> vector<8x128xf32>
      %39 = tpu.iota {dimensions = array<i32: 1>} : vector<8x128xi32>
      %c0_24 = arith.constant 0 : index
      %c0_25 = arith.constant 0 : index
      %40 = vector.load %arg6[%c0_24, %c0_25] : memref<8x1xi32, #tpu.memory_space<vmem>>, vector<8x1xi32>
      %41 = vector.broadcast %40 : vector<8x1xi32> to vector<8x128xi32>
      %42 = arith.cmpi eq, %39, %41 : vector<8x128xi32>
      %cst_26 = arith.constant 2.000000e-01 : f32
      %43 = vector.broadcast %cst_26 : f32 to vector<8x128xf32>
      %44 = arith.subf %38, %43 : vector<8x128xf32>
      %45 = arith.select %42, %44, %38 : vector<8x128xi1>, vector<8x128xf32>
      %cst_27 = arith.constant 3.000000e+01 : f32
      %46 = vector.broadcast %cst_27 : f32 to vector<8x128xf32>
      %47 = arith.mulf %45, %46 : vector<8x128xf32>
      %c10_i32 = arith.constant 10 : i32
      %48 = vector.broadcast %c10_i32 : i32 to vector<8x128xi32>
      %49 = arith.cmpi slt, %39, %48 : vector<8x128xi32>
      %cst_28 = arith.constant -1.000000e+30 : f32
      %50 = vector.broadcast %cst_28 : f32 to vector<8x128xf32>
      %51 = arith.select %49, %47, %50 : vector<8x128xi1>, vector<8x128xf32>
      %cst_29 = arith.constant dense<0xFF800000> : vector<8xf32>
      %52 = vector.multi_reduction <maximumf>, %51, %cst_29 [1] : vector<8x128xf32> to vector<8xf32>
      %53 = vector.shape_cast %52 : vector<8xf32> to vector<8x1xf32>
      %54 = vector.broadcast %53 : vector<8x1xf32> to vector<8x128xf32>
      %55 = arith.subf %51, %54 : vector<8x128xf32>
      %56 = math.exp %55 : vector<8x128xf32>
      %cst_30 = arith.constant dense<0.000000e+00> : vector<8xf32>
      %57 = vector.multi_reduction <add>, %56, %cst_30 [1] : vector<8x128xf32> to vector<8xf32>
      %58 = vector.shape_cast %57 : vector<8xf32> to vector<8x1xf32>
      %59 = math.log %58 : vector<8x1xf32>
      %60 = arith.addf %53, %59 : vector<8x1xf32>
      %cst_31 = arith.constant 0.000000e+00 : f32
      %61 = vector.broadcast %cst_31 : f32 to vector<8x128xf32>
      %62 = arith.select %42, %51, %61 : vector<8x128xi1>, vector<8x128xf32>
      %cst_32 = arith.constant dense<0.000000e+00> : vector<8xf32>
      %63 = vector.multi_reduction <add>, %62, %cst_32 [1] : vector<8x128xf32> to vector<8xf32>
      %64 = vector.shape_cast %63 : vector<8xf32> to vector<8x1xf32>
      %65 = arith.subf %60, %64 : vector<8x1xf32>
      %c0_33 = arith.constant 0 : index
      %c0_34 = arith.constant 0 : index
      %66 = vector.load %arg8[%c0_33, %c0_34] : memref<8x1xf32, #tpu.memory_space<vmem>>, vector<8x1xf32>
      tpu.vector_store %arg8[%c0_33, %c0_34], %65 {strides = array<i32>} : memref<8x1xf32, #tpu.memory_space<vmem>>, vector<8x1xf32>,
    } else {
    }
    return
  }
  func.func @transform_0(%arg0: i32, %arg1: i32) -> (i32, i32, i32) {
    %c0_i32 = arith.constant 0 : i32
    %c0_i32_0 = arith.constant 0 : i32
    return %arg0, %arg1, %c0_i32 : i32, i32, i32
  }
  func.func @transform_1(%arg0: i32, %arg1: i32) -> (i32, i32) {
    %c0_i32 = arith.constant 0 : i32
    %c0_i32_0 = arith.constant 0 : i32
    %c0_i32_1 = arith.constant 0 : i32
    return %c0_i32, %c0_i32_0 : i32, i32
  }
  func.func @transform_2(%arg0: i32, %arg1: i32) -> (i32, i32) {
    %c0_i32 = arith.constant 0 : i32
    %c0_i32_0 = arith.constant 0 : i32
    %c0_i32_1 = arith.constant 0 : i32
    return %c0_i32, %c0_i32_0 : i32, i32
  }
  func.func @transform_3(%arg0: i32, %arg1: i32) -> (i32, i32) {
    %c0_i32 = arith.constant 0 : i32
    %c0_i32_0 = arith.constant 0 : i32
    %c0_i32_1 = arith.constant 0 : i32
    return %c0_i32, %c0_i32_0 : i32, i32
  }
  func.func @transform_4(%arg0: i32, %arg1: i32) -> (i32, i32) {
    %c0_i32 = arith.constant 0 : i32
    %c0_i32_0 = arith.constant 0 : i32
    return %arg0, %c0_i32 : i32, i32
  }
  func.func @transform_5(%arg0: i32, %arg1: i32) -> (i32, i32) {
    %c0_i32 = arith.constant 0 : i32
    %c0_i32_0 = arith.constant 0 : i32
    return %arg0, %c0_i32 : i32, i32
  }
  func.func @transform_6(%arg0: i32, %arg1: i32) -> (i32, i32) {
    %c0_i32 = arith.constant 0 : i32
    %c0_i32_0 = arith.constant 0 : i32
    return %arg0, %c0_i32 : i32, i32
  }
}

</mosaic_0001>

<llo_original>
// kernel: sv_model_forward.1
$region0: #{sv_model_forward.1}
  #allocation0 [shape = 'u32[]', space=smem, size = 0x4, offset = 0x4, fixed_abs, tag = 'smem constant byte address 0x4 - core index']
  #allocation1 [shape = 'u32[144,128]{1,0:T(1,128)}', space=vmem, size = 0x12000, scoped, tag = 'internal scratch']
  #allocation2 [shape = 'f32[8,32]{1,0:T(8,128)}', space=vmem, size = 0x1000, scoped, tag = 'scratch operand']
  %s0 = inlined_call_operand.vmem [shape: f32[16,20,32], index: 0, kind: input, shape index: {}]
  %s1 = inlined_call_operand.vmem [shape: f32[32,256], index: 1, kind: input, shape index: {}]
  %s2 = inlined_call_operand.vmem [shape: f32[1,256], index: 2, kind: input, shape index: {}]
  %s3 = inlined_call_operand.vmem [shape: bf16[256,128], index: 3, kind: input, shape index: {}]
  %s4 = inlined_call_operand.vmem [shape: s32[16,1], index: 4, kind: input, shape index: {}]
  %s5 = inlined_call_operand.hbm [shape: f32[16,256], index: 5, kind: output, shape index: {0}]
  %s6 = inlined_call_operand.vmem [shape: f32[16,1], index: 6, kind: output, shape index: {1}]
  %7 = xla_tuple %s5, %s6
  %s8 = sld [smem:[#allocation0]]
  $region107: #{sv_model_forward.1} parent=0
    _
  %s10 = ssub.s32 1, %s8
  %s11 = scalar_select 0, %s10, %s8
  $region1: #{sv_model_forward.1} parent=0
    #allocation3 [shape = 'u8[65536]{0}', space=vmem, size = 0x10000, scoped, tag = 'input window, operand 0']
    #allocation4 [shape = 'u8[16384]{0}', space=vmem, size = 0x4000, scoped, tag = 'output window, operand 0']
    #allocation5 [shape = 's32[2]{0}', space=sflag, size = 0x8, scoped, tag = 'scoped memory for sv_model_forward.1']
    %12 = vsyncpa [#allocation5], 0
    %s13 = scalar_lea.sflag [#allocation5], 1
    %14 = vsyncpa %s13, 0
    loop: start=0, step=1, limit=8
    $region2: #{sv_model_forward.1} parent=1 // loop_pre_header
      _
    $region3: #{sv_model_forward.1} parent=1 // loop_header
      %s16 = sphi 0, %s20
      %p17 = scmp.ge.s32.totalorder %s16, 8
      %s23 = sphi 0, %s35
      %s24 = sphi 0, %s31
      %s25 = sphi 0, %s23
      %s26 = sphi 0, %s24
      %s27 = sphi 0, %s25
      %s28 = sphi 0, %s26
      %s40 = sphi 0, %s42
      %s43 = sphi 0, %s40
      %s44 = sphi 0, %s43
      %s60 = sphi 0, %s44
      %s64 = sphi 0, %s64
      %s66 = sphi 0, %s64
      %s67 = sphi 0, %s66
      %s81 = sphi 0, %s67
      %s85 = sphi 0, %s85
      %s87 = sphi 0, %s85
      %s88 = sphi 0, %s87
      %s102 = sphi 0, %s88
      %s106 = sphi 0, %s106
      %s108 = sphi 0, %s106
      %s109 = sphi 0, %s108
      %s123 = sphi 0, %s109
      %s129 = sphi 0, %s131
      %s132 = sphi 0, %s129
      %s133 = sphi 0, %s132
      %s149 = sphi 0, %s133
      %s155 = sphi 0, %s157
      %s158 = sphi 0, %s155
      %s159 = sphi 0, %s158
      %s175 = sphi 0, %s159
      %s181 = sphi 0, %s183
      %s184 = sphi 0, %s181
      %s185 = sphi 0, %s184
      %s201 = sphi 0, %s185
    $region4: #{sv_model_forward.1} parent=1 // loop_header_branch
      %19 = sbr.rel (%p17) target = $region8
    $region5: #{sv_model_forward.1} parent=1 // loop_body
      %s21 = ssub.s32 %s16, 1
      %s22 = ssub.s32 %s16, 2
      %s29 = sadd.s32 1, %s24
      %p30 = scmp.ge.s32.totalorder %s29, 3
      %s31 = scalar_select %p30, 0, %s29
      %s32 = sadd.s32 1, %s23
      %s33 = scalar_select %p30, %s32, %s23
      %p34 = scmp.ge.s32.totalorder %s33, 2
      %s35 = scalar_select %p34, 0, %s33
      %s36 = ssub.s32 %s23, %s35
      %s37 = ssub.s32 %s24, %s31
      %s38 = sor.u32 %s36, %s37
      %p39 = scmp.eq.s32.totalorder %s38, 0
      %s41 = sadd.s32 %s40, 1
      %s42 = scalar_select %p39, %s40, %s41
      %p45 = pneg %p39
      %p46 = scmp.eq.s32.totalorder %s16, 5
      %p47 = por %p45, %p46
      %p48 = scmp.ne.s32.totalorder %s40, %s43
      %p49 = scmp.eq.s32.totalorder %s16, 0
      %p50 = por %p48, %p49
      %p51 = scmp.ne.s32.totalorder %s40, %s43
      %p52 = scmp.eq.s32.totalorder %s21, 5
      %p53 = por %p51, %p52
      %p54 = scmp.ne.s32.totalorder %s43, %s44
      %p55 = scmp.eq.s32.totalorder %s21, 0
      %p56 = por %p54, %p55
      %p57 = scmp.ne.s32.totalorder %s43, %s44
      %p58 = scmp.eq.s32.totalorder %s22, 5
      %p59 = por %p57, %p58
      %p61 = scmp.ne.s32.totalorder %s44, %s60
      %p62 = scmp.eq.s32.totalorder %s22, 0
      %p63 = por %p61, %p62
      %s65 = sadd.s32 %s64, 1
      %p68 = scmp.eq.s32.totalorder %s16, 5
      %p69 = scmp.ne.s32.totalorder %s64, %s66
      %p70 = scmp.eq.s32.totalorder %s16, 0
      %p71 = por %p69, %p70
      %p72 = scmp.ne.s32.totalorder %s64, %s66
      %p73 = scmp.eq.s32.totalorder %s21, 5
      %p74 = por %p72, %p73
      %p75 = scmp.ne.s32.totalorder %s66, %s67
      %p76 = scmp.eq.s32.totalorder %s21, 0
      %p77 = por %p75, %p76
      %p78 = scmp.ne.s32.totalorder %s66, %s67
      %p79 = scmp.eq.s32.totalorder %s22, 5
      %p80 = por %p78, %p79
      %p82 = scmp.ne.s32.totalorder %s67, %s81
      %p83 = scmp.eq.s32.totalorder %s22, 0
      %p84 = por %p82, %p83
      %s86 = sadd.s32 %s85, 1
      %p89 = scmp.eq.s32.totalorder %s16, 5
      %p90 = scmp.ne.s32.totalorder %s85, %s87
      %p91 = scmp.eq.s32.totalorder %s16, 0
      %p92 = por %p90, %p91
      %p93 = scmp.ne.s32.totalorder %s85, %s87
      %p94 = scmp.eq.s32.totalorder %s21, 5
      %p95 = por %p93, %p94
      %p96 = scmp.ne.s32.totalorder %s87, %s88
      %p97 = scmp.eq.s32.totalorder %s21, 0
      %p98 = por %p96, %p97
      %p99 = scmp.ne.s32.totalorder %s87, %s88
      %p100 = scmp.eq.s32.totalorder %s22, 5
      %p101 = por %p99, %p100
      %p103 = scmp.ne.s32.totalorder %s88, %s102
      %p104 = scmp.eq.s32.totalorder %s22, 0
      %p105 = por %p103, %p104
      %s107 = sadd.s32 %s106, 1
      %p110 = scmp.eq.s32.totalorder %s16, 5
      %p111 = scmp.ne.s32.totalorder %s106, %s108
      %p112 = scmp.eq.s32.totalorder %s16, 0
      %p113 = por %p111, %p112
      %p114 = scmp.ne.s32.totalorder %s106, %s108
      %p115 = scmp.eq.s32.totalorder %s21, 5
      %p116 = por %p114, %p115
      %p117 = scmp.ne.s32.totalorder %s108, %s109
      %p118 = scmp.eq.s32.totalorder %s21, 0
      %p119 = por %p117, %p118
      %p120 = scmp.ne.s32.totalorder %s108, %s109
      %p121 = scmp.eq.s32.totalorder %s22, 5
      %p122 = por %p120, %p121
      %p124 = scmp.ne.s32.totalorder %s109, %s123
      %p125 = scmp.eq.s32.totalorder %s22, 0
      %p126 = por %p124, %p125
      %s127 = ssub.s32 %s23, %s35
      %p128 = scmp.eq.s32.totalorder %s127, 0
      %s130 = sadd.s32 %s129, 1
      %s131 = scalar_select %p128, %s129, %s130
      %p134 = pneg %p128
      %p135 = scmp.eq.s32.totalorder %s16, 5
      %p136 = por %p134, %p135
      %p137 = scmp.ne.s32.totalorder %s129, %s132
      %p138 = scmp.eq.s32.totalorder %s16, 0
      %p139 = por %p137, %p138
      %p140 = scmp.ne.s32.totalorder %s129, %s132
      %p141 = scmp.eq.s32.totalorder %s21, 5
      %p142 = por %p140, %p141
      %p143 = scmp.ne.s32.totalorder %s132, %s133
      %p144 = scmp.eq.s32.totalorder %s21, 0
      %p145 = por %p143, %p144
      %p146 = scmp.ne.s32.totalorder %s132, %s133
      %p147 = scmp.eq.s32.totalorder %s22, 5
      %p148 = por %p146, %p147
      %p150 = scmp.ne.s32.totalorder %s133, %s149
      %p151 = scmp.eq.s32.totalorder %s22, 0
      %p152 = por %p150, %p151
      %s153 = ssub.s32 %s23, %s35
      %p154 = scmp.eq.s32.totalorder %s153, 0
      %s156 = sadd.s32 %s155, 1
      %s157 = scalar_select %p154, %s155, %s156
      %p160 = pneg %p154
      %p161 = scmp.eq.s32.totalorder %s16, 5
      %p162 = por %p160, %p161
      %p163 = scmp.ne.s32.totalorder %s155, %s158
      %p164 = scmp.eq.s32.totalorder %s16, 0
      %p165 = por %p163, %p164
      %p166 = scmp.ne.s32.totalorder %s155, %s158
      %p167 = scmp.eq.s32.totalorder %s21, 5
      %p168 = por %p166, %p167
      %p169 = scmp.ne.s32.totalorder %s158, %s159
      %p170 = scmp.eq.s32.totalorder %s21, 0
      %p171 = por %p169, %p170
      %p172 = scmp.ne.s32.totalorder %s158, %s159
      %p173 = scmp.eq.s32.totalorder %s22, 5
      %p174 = por %p172, %p173
      %p176 = scmp.ne.s32.totalorder %s159, %s175
      %p177 = scmp.eq.s32.totalorder %s22, 0
      %p178 = por %p176, %p177
      %s179 = ssub.s32 %s23, %s35
      %p180 = scmp.eq.s32.totalorder %s179, 0
      %s182 = sadd.s32 %s181, 1
      %s183 = scalar_select %p180, %s181, %s182
      %p186 = pneg %p180
      %p187 = scmp.eq.s32.totalorder %s16, 5
      %p188 = por %p186, %p187
      %p189 = scmp.ne.s32.totalorder %s181, %s184
      %p190 = scmp.eq.s32.totalorder %s16, 0
      %p191 = por %p189, %p190
      %p192 = scmp.ne.s32.totalorder %s181, %s184
      %p193 = scmp.eq.s32.totalorder %s21, 5
      %p194 = por %p192, %p193
      %p195 = scmp.ne.s32.totalorder %s184, %s185
      %p196 = scmp.eq.s32.totalorder %s21, 0
      %p197 = por %p195, %p196
      %p198 = scmp.ne.s32.totalorder %s184, %s185
      %p199 = scmp.eq.s32.totalorder %s22, 5
      %p200 = por %p198, %p199
      %p202 = scmp.ne.s32.totalorder %s185, %s201
      %p203 = scmp.eq.s32.totalorder %s22, 0
      %p204 = por %p202, %p203
      %p205 = scmp.le.s32.totalorder 1, %s16
      %p206 = scmp.lt.s32.totalorder %s16, 7
      %p207 = pnand %p205, %p206
      %p208 = pneg %p207
      // Predicated region
      $region9: #{sv_model_forward.1} parent=5 // pred_check
        _
      $region10: #{sv_model_forward.1} parent=5 // pred_check_branch
        %210 = sbr.rel (%p207) target = $region12
      $region11: #{sv_model_forward.1} parent=5 // pred_region
        %s211 = ssub.s32 %s16, 1
        // Predicated region
        $region13: #{sv_model_forward.1} parent=11 // pred_check
          %p212 = pneg %p77
        $region14: #{sv_model_forward.1} parent=11 // pred_check_branch
          %214 = sbr.rel (%p212) target = $region16
        $region15: #{sv_model_forward.1} parent=11 // pred_region
          _
        $region16: #{sv_model_forward.1} parent=11 // pred_fallthru
          _
        // Predicated region
        $region17: #{sv_model_forward.1} parent=11 // pred_check
          %p215 = pneg %p98
        $region18: #{sv_model_forward.1} parent=11 // pred_check_branch
          %217 = sbr.rel (%p215) target = $region20
        $region19: #{sv_model_forward.1} parent=11 // pred_region
          _
        $region20: #{sv_model_forward.1} parent=11 // pred_fallthru
          _
        // Predicated region
        $region21: #{sv_model_forward.1} parent=11 // pred_check
          %p218 = pneg %p119
        $region22: #{sv_model_forward.1} parent=11 // pred_check_branch
          %220 = sbr.rel (%p218) target = $region24
        $region23: #{sv_model_forward.1} parent=11 // pred_region
          _
        $region24: #{sv_model_forward.1} parent=11 // pred_fallthru
          _
      $region12: #{sv_model_forward.1} parent=5 // pred_fallthru
        _
      %p221 = scmp.lt.s32.totalorder %s16, 6
      // Predicated region
      $region25: #{sv_model_forward.1} parent=5 // pred_check
        %p222 = pneg %p221
      $region26: #{sv_model_forward.1} parent=5 // pred_check_branch
        %224 = sbr.rel (%p222) target = $region28
      $region27: #{sv_model_forward.1} parent=5 // pred_region
        // Predicated region
        $region29: #{sv_model_forward.1} parent=27 // pred_check
          %p225 = pneg %p50
        $region30: #{sv_model_forward.1} parent=27 // pred_check_branch
          %227 = sbr.rel (%p225) target = $region32
        $region31: #{sv_model_forward.1} parent=27 // pred_region
          %s228 = sand.u32 %s40, 1
          %s229 = sand.u32 %s40, 1
          %s230 = smul.addr %s229, 64
          %s231 = scalar_lea.vmem [#allocation3], %s230
          %s232 = smul.u32 8, %s23
          %s233 = smul.addr %s232, 3
          %s234 = sadd.s32 %s24, %s233
          %s235 = smul.addr %s234, 8
          %s236 = scalar_lea.vmem %s0, %s235
          // Predicated region
          $region33: #{sv_model_forward.1} parent=31 // pred_check
            _
          $region34: #{sv_model_forward.1} parent=31 // pred_check_branch
            %238 = sbr.rel (0) target = $region36
          $region35: #{sv_model_forward.1} parent=31 // pred_region
            // Predicated region
            $region37: #{sv_model_forward.1} parent=35 // pred_check
              _
            $region38: #{sv_model_forward.1} parent=35 // pred_check_branch
              %240 = sbr.rel (0) target = $region40
            $region39: #{sv_model_forward.1} parent=35 // pred_region
              // Predicated region
              $region52: #{sv_model_forward.1} parent=39 // pred_check
                _
              $region53: #{sv_model_forward.1} parent=39 // pred_check_branch
                %270 = sbr.rel (0) target = $region55
              $region54: #{sv_model_forward.1} parent=39 // pred_region
                loop: start=0, step=1, limit=1
                $region56: #{sv_model_forward.1} parent=54 // loop_pre_header
                  _
                $region57: #{sv_model_forward.1} parent=54 // loop_header
                  %s272 = sphi 0, %s276
                  %p273 = scmp.ge.s32.totalorder %s272, 1
                  %s277 = sphi %s236, %s236
                  %s278 = sphi %s231, %s231
                $region58: #{sv_model_forward.1} parent=54 // loop_header_branch
                  %275 = sbr.rel (%p273) target = $region62
                $region59: #{sv_model_forward.1} parent=54 // loop_body
                  %v279 = vld [vmem:[%s277] sm:$0xff]
                  %280 = vst [vmem:[%s278] sm:$0xff] %v279
                  %v281 = vld [vmem:[%s277 + $0x18] sm:$0xff]
                  %282 = vst [vmem:[%s278 + $0x8] sm:$0xff] %v281
                  %v283 = vld [vmem:[%s277 + $0x30] sm:$0xff]
                  %284 = vst [vmem:[%s278 + $0x10] sm:$0xff] %v283
                  %v285 = vld [vmem:[%s277 + $0x48] sm:$0xff]
                  %286 = vst [vmem:[%s278 + $0x18] sm:$0xff] %v285
                  %v287 = vld [vmem:[%s277 + $0x60] sm:$0xff]
                  %288 = vst [vmem:[%s278 + $0x20] sm:$0xff] %v287
                  %v289 = vld [vmem:[%s277 + $0x78] sm:$0xff]
                  %290 = vst [vmem:[%s278 + $0x28] sm:$0xff] %v289
                  %v291 = vld [vmem:[%s277 + $0x90] sm:$0xff]
                  %292 = vst [vmem:[%s278 + $0x30] sm:$0xff] %v291
                  %v293 = vld [vmem:[%s277 + $0xa8] sm:$0xff]
                  %294 = vst [vmem:[%s278 + $0x38] sm:$0xff] %v293
                $region60: #{sv_model_forward.1} parent=54 // loop_footer
                  %s276 = sadd.s32 1, %s272
                $region61: #{sv_model_forward.1} parent=54 // loop_footer_branch
                  %271 = sbr.rel target = $region57
                $region62: #{sv_model_forward.1} parent=54 // loop_exit
                  _
              $region55: #{sv_model_forward.1} parent=39 // pred_fallthru
                _
              // Predicated region
              $region63: #{sv_model_forward.1} parent=39 // pred_check
                _
              $region64: #{sv_model_forward.1} parent=39 // pred_check_branch
                %296 = sbr.rel target = $region66
              $region65: #{sv_model_forward.1} parent=39 // pred_region
                _
              $region66: #{sv_model_forward.1} parent=39 // pred_fallthru
                _
            $region40: #{sv_model_forward.1} parent=35 // pred_fallthru
              _
            // Predicated region
            $region41: #{sv_model_forward.1} parent=35 // pred_check
              _
            $region42: #{sv_model_forward.1} parent=35 // pred_check_branch
              %242 = sbr.rel target = $region44
            $region43: #{sv_model_forward.1} parent=35 // pred_region
              %s244 = ssub.s32 256, 1
              loop: start=0, step=1, limit=1
              $region45: #{sv_model_forward.1} parent=43 // loop_pre_header
                _
              $region46: #{sv_model_forward.1} parent=43 // loop_header
                %s246 = sphi 0, %s250
                %p247 = scmp.ge.s32.totalorder %s246, 1
                %s251 = sphi %s236, %s236
                %s252 = sphi %s231, %s231
              $region47: #{sv_model_forward.1} parent=43 // loop_header_branch
                %249 = sbr.rel (%p247) target = $region51
              $region48: #{sv_model_forward.1} parent=43 // loop_body
                %v253 = vld [vmem:[%s251] sm:%s244]
                %254 = vst [vmem:[%s252] sm:%s244] %v253
                %v255 = vld [vmem:[%s251 + $0x18] sm:%s244]
                %256 = vst [vmem:[%s252 + $0x8] sm:%s244] %v255
                %v257 = vld [vmem:[%s251 + $0x30] sm:%s244]
                %258 = vst [vmem:[%s252 + $0x10] sm:%s244] %v257
                %v259 = vld [vmem:[%s251 + $0x48] sm:%s244]
                %260 = vst [vmem:[%s252 + $0x18] sm:%s244] %v259
                %v261 = vld [vmem:[%s251 + $0x60] sm:%s244]
                %262 = vst [vmem:[%s252 + $0x20] sm:%s244] %v261
                %v263 = vld [vmem:[%s251 + $0x78] sm:%s244]
                %264 = vst [vmem:[%s252 + $0x28] sm:%s244] %v263
                %v265 = vld [vmem:[%s251 + $0x90] sm:%s244]
                %266 = vst [vmem:[%s252 + $0x30] sm:%s244] %v265
                %v267 = vld [vmem:[%s251 + $0xa8] sm:%s244]
                %268 = vst [vmem:[%s252 + $0x38] sm:%s244] %v267
              $region49: #{sv_model_forward.1} parent=43 // loop_footer
                %s250 = sadd.s32 1, %s246
              $region50: #{sv_model_forward.1} parent=43 // loop_footer_branch
                %245 = sbr.rel target = $region46
              $region51: #{sv_model_forward.1} parent=43 // loop_exit
                _
            $region44: #{sv_model_forward.1} parent=35 // pred_fallthru
              _
          $region36: #{sv_model_forward.1} parent=31 // pred_fallthru
            _
          %297 = vnop
        $region32: #{sv_model_forward.1} parent=27 // pred_fallthru
          _
        // Predicated region
        $region67: #{sv_model_forward.1} parent=27 // pred_check
          %p298 = pneg %p139
        $region68: #{sv_model_forward.1} parent=27 // pred_check_branch
          %300 = sbr.rel (%p298) target = $region70
        $region69: #{sv_model_forward.1} parent=27 // pred_region
          %p301 = scmp.lt.s32.totalorder %s23, 1
          %s302 = scalar_select %p301, %s23, 1
          %s303 = smul.addr %s302, 8
          %s304 = scalar_lea.vmem %s4, %s303
        $region70: #{sv_model_forward.1} parent=27 // pred_fallthru
          _
      $region28: #{sv_model_forward.1} parent=5 // pred_fallthru
        _
      %p305 = scmp.le.s32.totalorder 1, %s16
      %p306 = scmp.lt.s32.totalorder %s16, 7
      %p307 = pnand %p305, %p306
      %p308 = pneg %p307
      // Predicated region
      $region71: #{sv_model_forward.1} parent=5 // pred_check
        _
      $region72: #{sv_model_forward.1} parent=5 // pred_check_branch
        %310 = sbr.rel (%p307) target = $region74
      $region73: #{sv_model_forward.1} parent=5 // pred_region
        %s311 = ssub.s32 %s16, 1
        %s312 = sand.u32 %s43, 1
        %s313 = sand.u32 %s43, 1
        %s314 = smul.addr %s313, 64
        %s315 = scalar_lea.vmem [#allocation3], %s314
        // Predicated region
        $region75: #{sv_model_forward.1} parent=73 // pred_check
          %p316 = pneg %p56
        $region76: #{sv_model_forward.1} parent=73 // pred_check_branch
          %318 = sbr.rel (%p316) target = $region78
        $region77: #{sv_model_forward.1} parent=73 // pred_region
          _
        $region78: #{sv_model_forward.1} parent=73 // pred_fallthru
          _
        %s319 = sand.u32 %s43, 1
        %s320 = sand.u32 %s43, 1
        %s321 = smul.addr %s320, 64
        %s322 = scalar_lea.vmem [#allocation3], %s321
        %p323 = pneg %p56
        %p324 = pneg %p53
        %p325 = pneg %p77
        %p326 = pneg %p74
        %p327 = pneg %p98
        %p328 = pneg %p95
        %p329 = pneg %p119
        %p330 = pneg %p116
        %p331 = scmp.lt.s32.totalorder %s25, 1
        %s332 = scalar_select %p331, %s25, 1
        %s333 = smul.addr %s332, 8
        %s334 = scalar_lea.vmem %s4, %s333
        %p335 = pneg %p145
        %p336 = pneg %p142
        %p337 = pneg %p171
        %p338 = pneg %p168
        %s339 = sand.u32 %s158, 1
        %s340 = scalar_lea.sflag [#allocation5], %s339
        %s341 = sand.u32 %s158, 1
        %s342 = smul.addr %s341, 16
        %s343 = scalar_lea.vmem [#allocation4], %s342
        %p344 = pneg %p197
        %p345 = pneg %p194
        %p346 = scmp.lt.s32.totalorder %s25, 1
        %s347 = scalar_select %p346, %s25, 1
        %s348 = smul.addr %s347, 8
        %s349 = scalar_lea.vmem %s6, %s348
        %s350 = smul.u32 8, %s25
        %p351 = scmp.lt.s32.totalorder %s25, 1
        %s352 = scalar_select %p351, %s25, 1
        %s353 = smul.addr %s352, 8
        %s354 = scalar_lea.vmem %s4, %s353
        %p355 = scmp.lt.s32.totalorder %s25, 1
        %s356 = scalar_select %p355, %s25, 1
        %s357 = smul.addr %s356, 8
        %s358 = scalar_lea.vmem %s6, %s357
        %p360 = scmp.eq.s32.totalorder %s26, 0
        // Predicated region
        $region79: #{sv_model_forward.1} parent=73 // pred_check
          %p361 = pneg %p360
        $region80: #{sv_model_forward.1} parent=73 // pred_check_branch
          %363 = sbr.rel (%p361) target = $region82
        $region81: #{sv_model_forward.1} parent=73 // pred_region
          %vm364 = vcmask 261120
          %365 = vst.msk [vmem:[#allocation2] sm:$0xff] %vm364, 0.0
        $region82: #{sv_model_forward.1} parent=73 // pred_fallthru
          _
        %v366 = vld [vmem:[%s315] sm:$0xff]
        %v367 = vld [vmem:[%s315 + $0x8] sm:$0xff]
        %v368 = vld [vmem:[%s315 + $0x10] sm:$0xff]
        %v369 = vld [vmem:[%s315 + $0x18] sm:$0xff]
        %v370 = vld [vmem:[%s315 + $0x20] sm:$0xff]
        %v371 = vld [vmem:[%s315 + $0x28] sm:$0xff]
        %v372 = vld [vmem:[%s315 + $0x30] sm:$0xff]
        %v373 = vld [vmem:[%s315 + $0x38] sm:$0xff]
        %s374 = smul.u32 %s26, 8
        %v375 = vlaneseq
        %v376 = vshrl.u32 %v375, 7
        %v377 = vstv %s374
        %v378 = vadd.s32 %v377, %v376
        %vm379 = vcmp.lt.s32.totalorder %v378, 20
        %v380 = vsel %vm379, %v366, 0.0
        %v381 = vsel %vm379, %v367, 0.0
        %v382 = vsel %vm379, %v368, 0.0
        %v383 = vsel %vm379, %v369, 0.0
        %v384 = vsel %vm379, %v370, 0.0
        %v385 = vsel %vm379, %v371, 0.0
        %v386 = vsel %vm379, %v372, 0.0
        %v387 = vsel %vm379, %v373, 0.0
        %v388 = vld [vmem:[#allocation2] sm:$0xff]
        %vm389 = vcmask 261120
        %v390 = vsel %vm389, %v380, 0.0
        %v391 = vrot.slane %v390, 4
        %v392 = vadd.f32 %v390, %v391
        %v393 = vrot.slane %v392, 2
        %v394 = vadd.f32 %v392, %v393
        %v395 = vrot.slane %v394, 1
        %v396 = vadd.f32 %v394, %v395
        %v397 = vsel %vm389, %v381, 0.0
        %v398 = vrot.slane %v397, 4
        %v399 = vadd.f32 %v397, %v398
        %v400 = vrot.slane %v399, 2
        %v401 = vadd.f32 %v399, %v400
        %v402 = vrot.slane %v401, 1
        %v403 = vadd.f32 %v401, %v402
        %v404 = vsel %vm389, %v382, 0.0
        %v405 = vrot.slane %v404, 4
        %v406 = vadd.f32 %v404, %v405
        %v407 = vrot.slane %v406, 2
        %v408 = vadd.f32 %v406, %v407
        %v409 = vrot.slane %v408, 1
        %v410 = vadd.f32 %v408, %v409
        %v411 = vsel %vm389, %v383, 0.0
        %v412 = vrot.slane %v411, 4
        %v413 = vadd.f32 %v411, %v412
        %v414 = vrot.slane %v413, 2
        %v415 = vadd.f32 %v413, %v414
        %v416 = vrot.slane %v415, 1
        %v417 = vadd.f32 %v415, %v416
        %v418 = vsel %vm389, %v384, 0.0
        %v419 = vrot.slane %v418, 4
        %v420 = vadd.f32 %v418, %v419
        %v421 = vrot.slane %v420, 2
        %v422 = vadd.f32 %v420, %v421
        %v423 = vrot.slane %v422, 1
        %v424 = vadd.f32 %v422, %v423
        %v425 = vsel %vm389, %v385, 0.0
        %v426 = vrot.slane %v425, 4
        %v427 = vadd.f32 %v425, %v426
        %v428 = vrot.slane %v427, 2
        %v429 = vadd.f32 %v427, %v428
        %v430 = vrot.slane %v429, 1
        %v431 = vadd.f32 %v429, %v430
        %v432 = vsel %vm389, %v386, 0.0
        %v433 = vrot.slane %v432, 4
        %v434 = vadd.f32 %v432, %v433
        %v435 = vrot.slane %v434, 2
        %v436 = vadd.f32 %v434, %v435
        %v437 = vrot.slane %v436, 1
        %v438 = vadd.f32 %v436, %v437
        %v439 = vsel %vm389, %v387, 0.0
        %v440 = vrot.slane %v439, 4
        %v441 = vadd.f32 %v439, %v440
        %v442 = vrot.slane %v441, 2
        %v443 = vadd.f32 %v441, %v442
        %v444 = vrot.slane %v443, 1
        %v445 = vadd.f32 %v443, %v444
        %vm454 = vcmask 1041409
        %v455 = vsel %vm454, %v403, %v396
        %vm456 = vcmask 1042434
        %v457 = vsel %vm456, %v410, %v455
        %vm458 = vcmask 1043459
        %v459 = vsel %vm458, %v417, %v457
        %vm460 = vcmask 1044484
        %v461 = vsel %vm460, %v424, %v459
        %vm462 = vcmask 1045509
        %v463 = vsel %vm462, %v431, %v461
        %vm464 = vcmask 1046534
        %v465 = vsel %vm464, %v438, %v463
        %vm466 = vcmask 1047559
        %v467 = vsel %vm466, %v445, %v465
        %v469 = vadd.f32 %v388, %v467
        %470 = vst.msk [vmem:[#allocation2] sm:$0xff] %vm389, %v469
        %p471 = scmp.eq.s32.totalorder %s26, 2
        // Predicated region
        $region83: #{sv_model_forward.1} parent=73 // pred_check
          %p472 = pneg %p471
        $region84: #{sv_model_forward.1} parent=73 // pred_check_branch
          %474 = sbr.rel (%p472) target = $region86
        $region85: #{sv_model_forward.1} parent=73 // pred_region
          %v475 = vld [vmem:[#allocation2] sm:$0xff]
          %v476 = vmul.f32 %v475, 0.05
          %v477 = vld [vmem:[%s1] sm:$0xff]
          %v478 = vld [vmem:[%s1 + $0x8] sm:$0xff]
          %v479 = vld [vmem:[%s1 + $0x10] sm:$0xff]
          %v480 = vld [vmem:[%s1 + $0x18] sm:$0xff]
          %v481 = vld [vmem:[%s1 + $0x20] sm:$0xff]
          %v482 = vld [vmem:[%s1 + $0x28] sm:$0xff]
          %v483 = vld [vmem:[%s1 + $0x30] sm:$0xff]
          %v484 = vld [vmem:[%s1 + $0x38] sm:$0xff]
          %v485 = vld [vmem:[%s2] sm:$0x3]
          %v487 = vlaneseq
          %v488 = vshrl.u32 %v487, 7
          %v489 = vsub.s32 0, %v488
          %v490 = vrot.slane %v485, %v489
          %v491 = vlaneseq
          %v492 = vshrl.u32 %v491, 7
          %v493 = vsub.s32 1, %v492
          %v494 = vrot.slane %v485, %v493
          %v498 = vsel %vm389, %v476, 0
          %500 = vmatprep.subr.mxu0 0.0
          %501 = vmatpush1.msra.mxu0 0.0
          %502 = vmatprep.subr.mxu0 0.0
          %503 = vmatpush1.msra.mxu0 0.0
          %504 = vmatprep.subr.mxu0 0.0
          %505 = vmatpush1.msra.mxu0 0.0
          %506 = vmatprep.subr.mxu0 0.0
          %507 = vmatpush1.msra.mxu0 0.0
          %508 = vmatprep.subr.mxu0 0.0
          %509 = vmatpush1.msra.mxu0 0.0
          %510 = vmatprep.subr.mxu0 0.0
          %511 = vmatpush1.msra.mxu0 0.0
          %512 = vmatprep.subr.mxu0 0.0
          %513 = vmatpush1.msra.mxu0 0.0
          %514 = vmatprep.subr.mxu0 0.0
          %515 = vmatpush1.msra.mxu0 0.0
          %516 = vmatprep.subr.mxu0 0.0
          %517 = vmatpush1.msra.mxu0 0.0
          %518 = vmatprep.subr.mxu0 0.0
          %519 = vmatpush1.msra.mxu0 0.0
          %520 = vmatprep.subr.mxu0 0.0
          %521 = vmatpush1.msra.mxu0 0.0
          %522 = vmatprep.subr.mxu0 0.0
          %523 = vmatpush1.msra.mxu0 0.0
          %524 = vmatprep.subr.mxu0 %v484
          %525 = vmatpush1.msra.mxu0 %v483
          %526 = vmatprep.subr.mxu0 %v482
          %527 = vmatpush1.msra.mxu0 %v481
          %528 = vmatprep.subr.mxu0 %v480
          %529 = vmatpush1.msra.mxu0 %v479
          %530 = vmatprep.subr.mxu0 %v478
          %531 = vmatpush1.msra.mxu0 %v477
          %532 = vmatprep.subr.mxu0 0.0
          %533 = vmatpush2.msra.mxu0 0.0
          %534 = vmatprep.subr.mxu0 0.0
          %535 = vmatpush2.msra.mxu0 0.0
          %536 = vmatprep.subr.mxu0 0.0
          %537 = vmatpush2.msra.mxu0 0.0
          %538 = vmatprep.subr.mxu0 0.0
          %539 = vmatpush2.msra.mxu0 0.0
          %540 = vmatprep.subr.mxu0 0.0
          %541 = vmatpush2.msra.mxu0 0.0
          %542 = vmatprep.subr.mxu0 0.0
          %543 = vmatpush2.msra.mxu0 0.0
          %544 = vmatprep.subr.mxu0 0.0
          %545 = vmatpush2.msra.mxu0 0.0
          %546 = vmatprep.subr.mxu0 0.0
          %547 = vmatpush2.msra.mxu0 0.0
          %548 = vmatprep.subr.mxu0 0.0
          %549 = vmatpush2.msra.mxu0 0.0
          %550 = vmatprep.subr.mxu0 0.0
          %551 = vmatpush2.msra.mxu0 0.0
          %552 = vmatprep.subr.mxu0 0.0
          %553 = vmatpush2.msra.mxu0 0.0
          %554 = vmatprep.subr.mxu0 0.0
          %555 = vmatpush2.msra.mxu0 0.0
          %556 = vmatprep.subr.mxu0 0.0
          %557 = vmatpush2.msra.mxu0 0.0
          %558 = vmatprep.subr.mxu0 0.0
          %559 = vmatpush2.msra.mxu0 0.0
          %560 = vmatprep.subr.mxu0 0.0
          %561 = vmatpush2.msra.mxu0 0.0
          %562 = vmatprep.subr.mxu0 0.0
          %563 = vmatpush2.msra.mxu0 0.0
          %564 = vmatprep.mubr.f32.mxu0 0.0
          %565 = vmatmul.mubr.f32.gmra.mxu0 %v498
          %v566 = vpop.f32.mrf.mxu0
          %v567 = vadd.f32 %v490, %v566
          %v568 = vpop.f32.mrf.mxu0
          %v569 = vadd.f32 %v494, %v568
          %570 = vdwg.mxu0
          %571 = vst [vmem:[%s343] sm:$0xff] %v567
          %572 = vst [vmem:[%s343 + $0x8] sm:$0xff] %v569
          %v573 = vmul.f32 %v567, %v567
          %v574 = vmul.f32 %v569, %v569
          %v575 = vadd.f32 %v573, %v574
          %576 = vadd.xlane.f32.xlu0 %v575
          %v577 = vpop.xlane.xlu0 %576
          %v578 = vrsqrt.pop %v577
          %v579 = vmul.f32 %v577, %v578
          %vm580 = vcmp.eq.f32.partialorder %v577, inf
          %v581 = vsel %vm580, %v577, %v579
          %vm582 = vcmp.eq.f32.partialorder %v577, 0.0
          %v583 = vand.u32 %v577, 2147483648
          %v584 = vsel %vm582, %v583, %v581
          %v585 = vmax.f32 %v584, 1e-12
          %v586 = vrcp.pop %v585
          %v587 = vmul.f32 %v567, %v586
          %v588 = vmul.f32 %v569, %v586
          %v589 = vpack.c.bf16 %v587, %v587
          %v590 = vpack.c.bf16 %v588, %v588
          %v591 = vld [vmem:[%s3] sm:$0xf]
          %v592 = vld [vmem:[%s3 + $0x4] sm:$0xf]
          %v593 = vld [vmem:[%s3 + $0x8] sm:$0xf]
          %v594 = vld [vmem:[%s3 + $0xc] sm:$0xf]
          %v595 = vld [vmem:[%s3 + $0x10] sm:$0xf]
          %v596 = vld [vmem:[%s3 + $0x14] sm:$0xf]
          %v597 = vld [vmem:[%s3 + $0x18] sm:$0xf]
          %v598 = vld [vmem:[%s3 + $0x1c] sm:$0xf]
          %v599 = vld [vmem:[%s3 + $0x20] sm:$0xf]
          %v600 = vld [vmem:[%s3 + $0x24] sm:$0xf]
          %v601 = vld [vmem:[%s3 + $0x28] sm:$0xf]
          %v602 = vld [vmem:[%s3 + $0x2c] sm:$0xf]
          %v603 = vld [vmem:[%s3 + $0x30] sm:$0xf]
          %v604 = vld [vmem:[%s3 + $0x34] sm:$0xf]
          %v605 = vld [vmem:[%s3 + $0x38] sm:$0xf]
          %v606 = vld [vmem:[%s3 + $0x3c] sm:$0xf]
          %v607 = vld [vmem:[%s3 + $0x40] sm:$0xf]
          %v608 = vld [vmem:[%s3 + $0x44] sm:$0xf]
          %v609 = vld [vmem:[%s3 + $0x48] sm:$0xf]
          %v610 = vld [vmem:[%s3 + $0x4c] sm:$0xf]
          %v611 = vld [vmem:[%s3 + $0x50] sm:$0xf]
          %v612 = vld [vmem:[%s3 + $0x54] sm:$0xf]
          %v613 = vld [vmem:[%s3 + $0x58] sm:$0xf]
          %v614 = vld [vmem:[%s3 + $0x5c] sm:$0xf]
          %v615 = vld [vmem:[%s3 + $0x60] sm:$0xf]
          %v616 = vld [vmem:[%s3 + $0x64] sm:$0xf]
          %v617 = vld [vmem:[%s3 + $0x68] sm:$0xf]
          %v618 = vld [vmem:[%s3 + $0x6c] sm:$0xf]
          %v619 = vld [vmem:[%s3 + $0x70] sm:$0xf]
          %v620 = vld [vmem:[%s3 + $0x74] sm:$0xf]
          %v621 = vld [vmem:[%s3 + $0x78] sm:$0xf]
          %v622 = vld [vmem:[%s3 + $0x7c] sm:$0xf]
          %v655 = vunpack.c.l.b16 %v591
          %v656 = vunpack.c.l.b16 %v592
          %v657 = vunpack.c.l.b16 %v593
          %v658 = vunpack.c.l.b16 %v594
          %v659 = vunpack.c.l.b16 %v595
          %v660 = vunpack.c.l.b16 %v596
          %v661 = vunpack.c.l.b16 %v597
          %v662 = vunpack.c.l.b16 %v598
          %v663 = vunpack.c.l.b16 %v599
          %v664 = vunpack.c.l.b16 %v600
          %v665 = vunpack.c.l.b16 %v601
          %v666 = vunpack.c.l.b16 %v602
          %v667 = vunpack.c.l.b16 %v603
          %v668 = vunpack.c.l.b16 %v604
          %v669 = vunpack.c.l.b16 %v605
          %v670 = vunpack.c.l.b16 %v606
          %v671 = vunpack.c.l.b16 %v607
          %v672 = vunpack.c.l.b16 %v608
          %v673 = vunpack.c.l.b16 %v609
          %v674 = vunpack.c.l.b16 %v610
          %v675 = vunpack.c.l.b16 %v611
          %v676 = vunpack.c.l.b16 %v612
          %v677 = vunpack.c.l.b16 %v613
          %v678 = vunpack.c.l.b16 %v614
          %v679 = vunpack.c.l.b16 %v615
          %v680 = vunpack.c.l.b16 %v616
          %v681 = vunpack.c.l.b16 %v617
          %v682 = vunpack.c.l.b16 %v618
          %v683 = vunpack.c.l.b16 %v619
          %v684 = vunpack.c.l.b16 %v620
          %v685 = vunpack.c.l.b16 %v621
          %v686 = vunpack.c.l.b16 %v622
          %v687 = vpack.c.b16 %v656, %v655
          %v688 = vpack.c.b16 %v658, %v657
          %v689 = vpack.c.b16 %v660, %v659
          %v690 = vpack.c.b16 %v662, %v661
          %v691 = vpack.c.b16 %v664, %v663
          %v692 = vpack.c.b16 %v666, %v665
          %v693 = vpack.c.b16 %v668, %v667
          %v694 = vpack.c.b16 %v670, %v669
          %v695 = vpack.c.b16 %v672, %v671
          %v696 = vpack.c.b16 %v674, %v673
          %v697 = vpack.c.b16 %v676, %v675
          %v698 = vpack.c.b16 %v678, %v677
          %v699 = vpack.c.b16 %v680, %v679
          %v700 = vpack.c.b16 %v682, %v681
          %v701 = vpack.c.b16 %v684, %v683
          %v702 = vpack.c.b16 %v686, %v685
          %719 = vmatprep.subr.bf16.mxu0 0
          %720 = vmatpush1.bf16.msra.mxu0 %v694
          %721 = vmatprep.subr.bf16.mxu0 0
          %722 = vmatpush1.bf16.msra.mxu0 %v693
          %723 = vmatprep.subr.bf16.mxu0 0
          %724 = vmatpush1.bf16.msra.mxu0 %v692
          %725 = vmatprep.subr.bf16.mxu0 0
          %726 = vmatpush1.bf16.msra.mxu0 %v691
          %727 = vmatprep.subr.bf16.mxu0 0
          %728 = vmatpush1.bf16.msra.mxu0 %v690
          %729 = vmatprep.subr.bf16.mxu0 0
          %730 = vmatpush1.bf16.msra.mxu0 %v689
          %731 = vmatprep.subr.bf16.mxu0 0
          %732 = vmatpush1.bf16.msra.mxu0 %v688
          %733 = vmatprep.subr.bf16.mxu0 0
          %734 = vmatpush1.bf16.msra.mxu0 %v687
          %735 = vmatprep.subr.bf16.mxu0 0
          %736 = vmatpush2.bf16.msra.mxu0 %v702
          %737 = vmatprep.subr.bf16.mxu0 0
          %738 = vmatpush2.bf16.msra.mxu0 %v701
          %739 = vmatprep.subr.bf16.mxu0 0
          %740 = vmatpush2.bf16.msra.mxu0 %v700
          %741 = vmatprep.subr.bf16.mxu0 0
          %742 = vmatpush2.bf16.msra.mxu0 %v699
          %743 = vmatprep.subr.bf16.mxu0 0
          %744 = vmatpush2.bf16.msra.mxu0 %v698
          %745 = vmatprep.subr.bf16.mxu0 0
          %746 = vmatpush2.bf16.msra.mxu0 %v697
          %747 = vmatprep.subr.bf16.mxu0 0
          %748 = vmatpush2.bf16.msra.mxu0 %v696
          %749 = vmatprep.subr.bf16.mxu0 0
          %750 = vmatpush2.bf16.msra.mxu0 %v695
          %751 = vmatprep.mubr.bf16.mxu0 %v590
          %752 = vmatmul.mubr.bf16.gmra.mxu0 %v589
          %v753 = vpop.f32.mrf.mxu0
          %v754 = vadd.f32 0.0, %v753
          %v755 = vpop.f32.mrf.mxu0
          %v756 = vpop.f32.mrf.mxu0
          %v757 = vpop.f32.mrf.mxu0
          %758 = vdwg.mxu0
          %v759 = vlaneseq
          %v760 = vand.u32 %v759, 127
          %v761 = vld [vmem:[%s354] sm:$0xff]
          %762 = vset.pattern.permute.xlu0 0
          %763 = vperm.xlu0 %762, %v761
          %v764 = vpop.permute.xlu0 %763
          %vm765 = vcmp.eq.s32.totalorder %v760, %v764
          %v766 = vsub.f32 %v754, 0.2
          %v767 = vsel %vm765, %v766, %v754
          %v768 = vmul.f32 %v767, 30.0
          %vm769 = vcmp.lt.s32.totalorder %v760, 10
          %v770 = vsel %vm769, %v768, -1e+30
          %771 = vmax.xlane.f32.xlu0 %v770
          %v772 = vpop.xlane.xlu0 %771
          %v773 = vsub.f32 %v770, %v772
          %v774 = vmul.f32 %v773, 1.442695
          %v775 = vpow.pop %v774
          %776 = vadd.xlane.f32.xlu0 %v775
          %v777 = vpop.xlane.xlu0 %776
          %v778 = vlog2.pop %v777
          %v779 = vmul.f32 %v778, 0.6931472
          %v780 = vadd.f32 %v772, %v779
          %v781 = vsel %vm765, %v770, 0.0
          %782 = vadd.xlane.f32.xlu0 %v781
          %v783 = vpop.xlane.xlu0 %782
          %v784 = vsub.f32 %v780, %v783
          %vm785 = vcmask 7168
          %786 = vst.msk [vmem:[%s358] sm:$0xff] %vm785, %v784
        $region86: #{sv_model_forward.1} parent=73 // pred_fallthru
          _
        %s787 = sand.u32 %s158, 1
        %s788 = scalar_lea.sflag [#allocation5], %s787
        %s789 = sand.u32 %s158, 1
        %s790 = smul.addr %s789, 16
        %s791 = scalar_lea.vmem [#allocation4], %s790
        %p792 = scmp.lt.s32.totalorder %s25, 1
        %s793 = scalar_select %p792, %s25, 1
        %s794 = smul.addr %s793, 8
        %s795 = scalar_lea.vmem %s6, %s794
        // Predicated region
        $region87: #{sv_model_forward.1} parent=73 // pred_check
          %p796 = pneg %p168
        $region88: #{sv_model_forward.1} parent=73 // pred_check_branch
          %798 = sbr.rel (%p796) target = $region90
        $region89: #{sv_model_forward.1} parent=73 // pred_region
          %s800 = ssub.s32 256, 256
          %801 = vsyncadd %s788, %s800
          %s802 = smul.addr %s25, 2
          %s803 = smul.addr %s802, 128
          %s804 = scalar_lea.hbm %s5, %s803
          %s806 = sshll.u32 %s791, 4
          %s807 = int_to_ptr.vmem [resolvable:$true] %s806
          %809 = dma.vmem_to_hbm [thread:$0]  %s807, 256, %s804, %s788
        $region90: #{sv_model_forward.1} parent=73 // pred_fallthru
          _
        // Predicated region
        $region91: #{sv_model_forward.1} parent=73 // pred_check
          %p810 = pneg %p194
        $region92: #{sv_model_forward.1} parent=73 // pred_check_branch
          %812 = sbr.rel (%p810) target = $region94
        $region93: #{sv_model_forward.1} parent=73 // pred_region
          _
        $region94: #{sv_model_forward.1} parent=73 // pred_fallthru
          _
      $region74: #{sv_model_forward.1} parent=5 // pred_fallthru
        _
      %p813 = scmp.le.s32.totalorder 2, %s16
      // Predicated region
      $region95: #{sv_model_forward.1} parent=5 // pred_check
        %p814 = pneg %p813
      $region96: #{sv_model_forward.1} parent=5 // pred_check_branch
        %816 = sbr.rel (%p814) target = $region98
      $region97: #{sv_model_forward.1} parent=5 // pred_region
        %s817 = ssub.s32 %s16, 2
        // Predicated region
        $region99: #{sv_model_forward.1} parent=97 // pred_check
          %p818 = pneg %p174
        $region100: #{sv_model_forward.1} parent=97 // pred_check_branch
          %820 = sbr.rel (%p818) target = $region102
        $region101: #{sv_model_forward.1} parent=97 // pred_region
          %s821 = sand.u32 %s159, 1
          %s822 = scalar_lea.sflag [#allocation5], %s821
          %s823 = sand.u32 %s159, 1
          %s824 = smul.addr %s823, 16
          %s825 = scalar_lea.vmem [#allocation4], %s824
          %826 = dma.done %s822, 256
        $region102: #{sv_model_forward.1} parent=97 // pred_fallthru
          _
        // Predicated region
        $region103: #{sv_model_forward.1} parent=97 // pred_check
          %p827 = pneg %p200
        $region104: #{sv_model_forward.1} parent=97 // pred_check_branch
          %829 = sbr.rel (%p827) target = $region106
        $region105: #{sv_model_forward.1} parent=97 // pred_region
          %p830 = scmp.lt.s32.totalorder %s27, 1
          %s831 = scalar_select %p830, %s27, 1
          %s832 = smul.addr %s831, 8
          %s833 = scalar_lea.vmem %s6, %s832
        $region106: #{sv_model_forward.1} parent=97 // pred_fallthru
          _
      $region98: #{sv_model_forward.1} parent=5 // pred_fallthru
        _
    $region6: #{sv_model_forward.1} parent=1 // loop_footer
      %s20 = sadd.s32 1, %s16
    $region7: #{sv_model_forward.1} parent=1 // loop_footer_branch
      %15 = sbr.rel target = $region3
    $region8: #{sv_model_forward.1} parent=1 // loop_exit
      _
    %834 = vsyncpa [#allocation5], 1
    %s835 = scalar_lea.sflag [#allocation5], 1
    %836 = vsyncpa %s835, 1

</llo_original>
